<compile_context>
chip_gen: v7x
topology: tpu7x:2x2x1
jax: 0.10.0
libtpu: 0.0.40
codegen_flags: <defaults>
</compile_context>

<pallas_src>
import jax
import jax.numpy as jnp
import numpy as np
from jax.experimental import pallas as pl
from jax.experimental.pallas import tpu as pltpu

_PAD_LOGIT = -1.0e4  # sigmoid(-1e4) == 0 and the BCE term == 0 exactly in f32


def _round_up(x, m):
    return ((x + m - 1) // m) * m


def _dc_bce_kernel(x_ref, y_ref, o_ref, inter_acc, pred_acc, gt_acc, bce_acc):
    k = pl.program_id(1)

    @pl.when(k == 0)
    def _():
        inter_acc[...] = jnp.zeros_like(inter_acc)
        pred_acc[...] = jnp.zeros_like(pred_acc)
        gt_acc[...] = jnp.zeros_like(gt_acc)
        bce_acc[...] = jnp.zeros_like(bce_acc)

    x = x_ref[...].astype(jnp.float32)
    y = y_ref[...].astype(jnp.float32)

    # One shared exponential feeds both sigmoid and BCE-with-logits.
    e = jnp.exp(-jnp.abs(x))                        # EUP: exp
    inv = 1.0 / (1.0 + e)                           # exact reciprocal
    p = jnp.where(x >= 0.0, 1.0, e) * inv           # == sigmoid(x)
    # Numerically stable BCE-with-logits.
    bce = jnp.maximum(x, 0.0) - x * y + jnp.log1p(e)    # EUP: log1p

    # Per-(b,c)-row partial sums (lane reduces, accumulated across tiles).
    inter_acc[...] += jnp.sum(p * y, axis=-1, keepdims=True)
    pred_acc[...] += jnp.sum(p, axis=-1, keepdims=True)
    gt_acc[...] += jnp.sum(y, axis=-1, keepdims=True)
    bce_acc[...] += jnp.sum(bce, axis=-1, keepdims=True)

    @pl.when(k == pl.num_programs(1) - 1)
    def _():
        o_ref[0, :, 0:1] = inter_acc[...]
        o_ref[0, :, 1:2] = pred_acc[...]
        o_ref[0, :, 2:3] = gt_acc[...]
        o_ref[0, :, 3:4] = bce_acc[...]


def dc_and_bce_loss(net_output, target, *, weight_ce=1.0, weight_dice=1.0,
                    smooth=1.0, n_par=2, max_tile_s=16384):
    """net_output, target: [B, C, *spatial] (NCHW / NCDHW). target is one-hot."""
    assert net_output.shape == target.shape
    B, C = net_output.shape[0], net_output.shape[1]
    S = 1
    for d in net_output.shape[2:]:
        S *= int(d)
    BC = B * C
    BC_pad = _round_up(BC, 8)

    # ---- per-generation VMEM budgeting (v7x: 64 MiB/TC; v5e/v6e: 128 MiB) ----
    try:
        vmem_cap = int(pltpu.get_tpu_info().vmem_capacity_bytes)
    except Exception:  # be conservative if the query is unavailable
        vmem_cap = 64 << 20
    x_item = jnp.dtype(net_output.dtype).itemsize
    y_item = 2  # target shipped as bf16 (one-hot 0/1 is exact in bf16)
    in_budget = min(vmem_cap // 3, 32 << 20)  # double-buffered input slabs

    per_core = -(-S // n_par)
    tile_cap = max(128, (in_budget // (2 * BC_pad * (x_item + y_item))) // 128 * 128)
    tile_s = max(128, min(tile_cap, max_tile_s, _round_up(per_core, 128)))
    steps = -(-per_core // tile_s)
    S_pad = n_par * steps * tile_s

    x2d = net_output.reshape(BC, S)
    y2d = target.reshape(BC, S)
    if (BC_pad, S_pad) != (BC, S):
        # Pad logits with a large negative value and targets with 0: both the
        # BCE term and all dice partial sums of padded elements are exactly 0.
        x2d = jnp.pad(x2d, ((0, BC_pad - BC), (0, S_pad - S)),
                      constant_values=_PAD_LOGIT)
        y2d = jnp.pad(y2d, ((0, BC_pad - BC), (0, S_pad - S)))
    y2d = y2d.astype(jnp.bfloat16)  # halves target HBM traffic; 0/1 exact

    in_bytes = 2 * BC_pad * tile_s * (x_item + y_item)  # double-buffered inputs
    vmem_limit = int(min(max(in_bytes + (8 << 20), 32 << 20),
                         max(vmem_cap - (8 << 20), 32 << 20)))

    partials = pl.pallas_call(
        _dc_bce_kernel,
        out_shape=jax.ShapeDtypeStruct((n_par, BC_pad, 4), jnp.float32),
        grid_spec=pltpu.PrefetchScalarGridSpec(
            num_scalar_prefetch=0,
            grid=(n_par, steps),
            in_specs=[
                pl.BlockSpec((BC_pad, tile_s), lambda p, k: (0, p * steps + k)),
                pl.BlockSpec((BC_pad, tile_s), lambda p, k: (0, p * steps + k)),
            ],
            out_specs=pl.BlockSpec((1, BC_pad, 4), lambda p, k: (p, 0, 0)),
            scratch_shapes=[
                pltpu.VMEM((BC_pad, 1), jnp.float32),   # intersect
                pltpu.VMEM((BC_pad, 1), jnp.float32),   # sum_pred
                pltpu.VMEM((BC_pad, 1), jnp.float32),   # sum_gt
                pltpu.VMEM((BC_pad, 1), jnp.float32),   # per-row bce sum
            ],
        ),
        compiler_params=pltpu.CompilerParams(
            dimension_semantics=("parallel", "arbitrary"),
            vmem_limit_bytes=vmem_limit),
    )(x2d, y2d)

    # ---- tiny epilogue in plain JAX (O(BC) work) ----
    sums = jnp.sum(partials, axis=0)                 # (BC_pad, 4)
    intersect = sums[:BC, 0]
    sum_pred = sums[:BC, 1]
    sum_gt = sums[:BC, 2]
    dc = (2.0 * intersect + smooth) / jnp.maximum(sum_gt + sum_pred + smooth, 1e-8)
    dice_loss = -jnp.mean(dc)
    ce_loss = jnp.sum(sums[:, 3]) / float(BC * S)    # padded contributions are 0
    return weight_ce * ce_loss + weight_dice * dice_loss

# TODO(synk): the use_ignore_label=True branch (mask taken from target[:, -1]) is
# not implemented; this kernel covers the default use_ignore_label=False path.


def _reference(net_output, target, weight_ce=1.0, weight_dice=1.0, smooth=1.0):
    x = net_output.astype(jnp.float32)
    y = target.astype(jnp.float32)
    p = jax.nn.sigmoid(x)
    axes = tuple(range(2, x.ndim))
    intersect = jnp.sum(p * y, axes)
    sum_pred = jnp.sum(p, axes)
    sum_gt = jnp.sum(y, axes)
    dc = (2.0 * intersect + smooth) / jnp.maximum(sum_gt + sum_pred + smooth, 1e-8)
    dice_loss = -jnp.mean(dc)
    bce = jnp.mean(jnp.maximum(x, 0.0) - x * y + jnp.log1p(jnp.exp(-jnp.abs(x))))
    return weight_ce * bce + weight_dice * dice_loss


if __name__ == "__main__":
    B, C, H, W = 2, 4, 16, 16
    key = jax.random.PRNGKey(0)
    k_logits, k_labels = jax.random.split(key)

    net_output = jax.random.normal(k_logits, (B, C, H, W), dtype=jnp.float32)
    labels = jax.random.randint(k_labels, (B, H, W), 0, C)
    # one-hot target in NCHW layout (what DC_and_BCE_loss expects)
    target = jax.nn.one_hot(labels, C, axis=1, dtype=jnp.float32)  # [B, C, H, W]

    loss = dc_and_bce_loss(net_output, target)
    loss = jax.block_until_ready(loss)

    ref = _reference(net_output, target)
    assert np.allclose(np.asarray(loss), np.asarray(ref), rtol=1e-5, atol=1e-5), \
        (float(loss), float(ref))
    print("KERNEL_OK")
</pallas_src>

<mosaic_0001>
module attributes {stable_mosaic.version = 11 : i64} {
  func.func @_dc_bce_kernel(%arg0: i32, %arg1: i32, %arg2: memref<8x128xf32, #tpu.memory_space<vmem>>, %arg3: memref<8x128xbf16, #tpu.memory_space<vmem>>, %arg4: memref<1x8x4xf32, #tpu.memory_space<vmem>>, %arg5: memref<8x1xf32, #tpu.memory_space<vmem>>, %arg6: memref<8x1xf32, #tpu.memory_space<vmem>>, %arg7: memref<8x1xf32, #tpu.memory_space<vmem>>, %arg8: memref<8x1xf32, #tpu.memory_space<vmem>>) attributes {dimension_semantics = [#tpu.dimension_semantics<parallel>, #tpu.dimension_semantics<arbitrary>], iteration_bounds = array<i64: 2, 1>, scalar_prefetch = 0 : i64, scratch_operands = 4 : i64, tpu.core_type = #tpu.core_type<tc>, window_params = [{transform_indices = @transform_0, window_bounds = array<i64: 8, 128>}, {transform_indices = @transform_1, window_bounds = array<i64: 8, 128>}, {transform_indices = @transform_2, window_bounds = array<i64: 1, 8, 4>}]} {
    %c0_i32 = arith.constant 0 : i32
    %0 = arith.cmpi eq, %arg1, %c0_i32 : i32
    %1 = arith.extui %0 : i1 to i32
    %c0_i32_0 = arith.constant 0 : i32
    %2 = arith.cmpi ne, %1, %c0_i32_0 : i32
    scf.if %2 {
      %cst_31 = arith.constant 0.000000e+00 : f32
      %49 = vector.broadcast %cst_31 : f32 to vector<8x1xf32>
      %c0_32 = arith.constant 0 : index
      %c0_33 = arith.constant 0 : index
      %50 = vector.load %arg5[%c0_32, %c0_33] : memref<8x1xf32, #tpu.memory_space<vmem>>, vector<8x1xf32>
      tpu.vector_store %arg5[%c0_32, %c0_33], %49 {strides = array<i32>} : memref<8x1xf32, #tpu.memory_space<vmem>>, vector<8x1xf32>,
      %cst_34 = arith.constant 0.000000e+00 : f32
      %51 = vector.broadcast %cst_34 : f32 to vector<8x1xf32>
      %c0_35 = arith.constant 0 : index
      %c0_36 = arith.constant 0 : index
      %52 = vector.load %arg6[%c0_35, %c0_36] : memref<8x1xf32, #tpu.memory_space<vmem>>, vector<8x1xf32>
      tpu.vector_store %arg6[%c0_35, %c0_36], %51 {strides = array<i32>} : memref<8x1xf32, #tpu.memory_space<vmem>>, vector<8x1xf32>,
      %cst_37 = arith.constant 0.000000e+00 : f32
      %53 = vector.broadcast %cst_37 : f32 to vector<8x1xf32>
      %c0_38 = arith.constant 0 : index
      %c0_39 = arith.constant 0 : index
      %54 = vector.load %arg7[%c0_38, %c0_39] : memref<8x1xf32, #tpu.memory_space<vmem>>, vector<8x1xf32>
      tpu.vector_store %arg7[%c0_38, %c0_39], %53 {strides = array<i32>} : memref<8x1xf32, #tpu.memory_space<vmem>>, vector<8x1xf32>,
      %cst_40 = arith.constant 0.000000e+00 : f32
      %55 = vector.broadcast %cst_40 : f32 to vector<8x1xf32>
      %c0_41 = arith.constant 0 : index
      %c0_42 = arith.constant 0 : index
      %56 = vector.load %arg8[%c0_41, %c0_42] : memref<8x1xf32, #tpu.memory_space<vmem>>, vector<8x1xf32>
      tpu.vector_store %arg8[%c0_41, %c0_42], %55 {strides = array<i32>} : memref<8x1xf32, #tpu.memory_space<vmem>>, vector<8x1xf32>,
    } else {
    }
    %c0 = arith.constant 0 : index
    %c0_1 = arith.constant 0 : index
    %3 = vector.load %arg2[%c0, %c0_1] : memref<8x128xf32, #tpu.memory_space<vmem>>, vector<8x128xf32>
    %c0_2 = arith.constant 0 : index
    %c0_3 = arith.constant 0 : index
    %4 = vector.load %arg3[%c0_2, %c0_3] : memref<8x128xbf16, #tpu.memory_space<vmem>>, vector<8x128xbf16>
    %5 = arith.extf %4 : vector<8x128xbf16> to vector<8x128xf32>
    %6 = math.absf %3 : vector<8x128xf32>
    %cst = arith.constant 0.000000e+00 : f32
    %7 = vector.broadcast %cst : f32 to vector<8x128xf32>
    %8 = arith.subf %7, %6 : vector<8x128xf32>
    %9 = math.exp %8 : vector<8x128xf32>
    %cst_4 = arith.constant 1.000000e+00 : f32
    %10 = vector.broadcast %cst_4 : f32 to vector<8x128xf32>
    %11 = arith.addf %10, %9 : vector<8x128xf32>
    %cst_5 = arith.constant 1.000000e+00 : f32
    %12 = vector.broadcast %cst_5 : f32 to vector<8x128xf32>
    %13 = arith.divf %12, %11 : vector<8x128xf32>
    %cst_6 = arith.constant 0.000000e+00 : f32
    %14 = vector.broadcast %cst_6 : f32 to vector<8x128xf32>
    %15 = arith.cmpf oge, %3, %14 : vector<8x128xf32>
    %cst_7 = arith.constant 1.000000e+00 : f32
    %16 = vector.broadcast %cst_7 : f32 to vector<8x128xf32>
    %17 = arith.select %15, %16, %9 : vector<8x128xi1>, vector<8x128xf32>
    %18 = arith.mulf %17, %13 : vector<8x128xf32>
    %cst_8 = arith.constant 0.000000e+00 : f32
    %19 = vector.broadcast %cst_8 : f32 to vector<8x128xf32>
    %20 = arith.maximumf %3, %19 : vector<8x128xf32>
    %21 = arith.mulf %3, %5 : vector<8x128xf32>
    %22 = arith.subf %20, %21 : vector<8x128xf32>
    %23 = math.log1p %9 : vector<8x128xf32>
    %24 = arith.addf %22, %23 : vector<8x128xf32>
    %c0_9 = arith.constant 0 : index
    %c0_10 = arith.constant 0 : index
    %25 = vector.load %arg5[%c0_9, %c0_10] : memref<8x1xf32, #tpu.memory_space<vmem>>, vector<8x1xf32>
    %26 = arith.mulf %18, %5 : vector<8x128xf32>
    %cst_11 = arith.constant dense<0.000000e+00> : vector<8xf32>
    %27 = vector.multi_reduction <add>, %26, %cst_11 [1] : vector<8x128xf32> to vector<8xf32>
    %28 = vector.shape_cast %27 : vector<8xf32> to vector<8x1xf32>
    %29 = arith.addf %25, %28 : vector<8x1xf32>
    %c0_12 = arith.constant 0 : index
    %c0_13 = arith.constant 0 : index
    %30 = vector.load %arg5[%c0_12, %c0_13] : memref<8x1xf32, #tpu.memory_space<vmem>>, vector<8x1xf32>
    tpu.vector_store %arg5[%c0_12, %c0_13], %29 {strides = array<i32>} : memref<8x1xf32, #tpu.memory_space<vmem>>, vector<8x1xf32>,
    %c0_14 = arith.constant 0 : index
    %c0_15 = arith.constant 0 : index
    %31 = vector.load %arg6[%c0_14, %c0_15] : memref<8x1xf32, #tpu.memory_space<vmem>>, vector<8x1xf32>
    %cst_16 = arith.constant dense<0.000000e+00> : vector<8xf32>
    %32 = vector.multi_reduction <add>, %18, %cst_16 [1] : vector<8x128xf32> to vector<8xf32>
    %33 = vector.shape_cast %32 : vector<8xf32> to vector<8x1xf32>
    %34 = arith.addf %31, %33 : vector<8x1xf32>
    %c0_17 = arith.constant 0 : index
    %c0_18 = arith.constant 0 : index
    %35 = vector.load %arg6[%c0_17, %c0_18] : memref<8x1xf32, #tpu.memory_space<vmem>>, vector<8x1xf32>
    tpu.vector_store %arg6[%c0_17, %c0_18], %34 {strides = array<i32>} : memref<8x1xf32, #tpu.memory_space<vmem>>, vector<8x1xf32>,
    %c0_19 = arith.constant 0 : index
    %c0_20 = arith.constant 0 : index
    %36 = vector.load %arg7[%c0_19, %c0_20] : memref<8x1xf32, #tpu.memory_space<vmem>>, vector<8x1xf32>
    %cst_21 = arith.constant dense<0.000000e+00> : vector<8xf32>
    %37 = vector.multi_reduction <add>, %5, %cst_21 [1] : vector<8x128xf32> to vector<8xf32>
    %38 = vector.shape_cast %37 : vector<8xf32> to vector<8x1xf32>
    %39 = arith.addf %36, %38 : vector<8x1xf32>
    %c0_22 = arith.constant 0 : index
    %c0_23 = arith.constant 0 : index
    %40 = vector.load %arg7[%c0_22, %c0_23] : memref<8x1xf32, #tpu.memory_space<vmem>>, vector<8x1xf32>
    tpu.vector_store %arg7[%c0_22, %c0_23], %39 {strides = array<i32>} : memref<8x1xf32, #tpu.memory_space<vmem>>, vector<8x1xf32>,
    %c0_24 = arith.constant 0 : index
    %c0_25 = arith.constant 0 : index
    %41 = vector.load %arg8[%c0_24, %c0_25] : memref<8x1xf32, #tpu.memory_space<vmem>>, vector<8x1xf32>
    %cst_26 = arith.constant dense<0.000000e+00> : vector<8xf32>
    %42 = vector.multi_reduction <add>, %24, %cst_26 [1] : vector<8x128xf32> to vector<8xf32>
    %43 = vector.shape_cast %42 : vector<8xf32> to vector<8x1xf32>
    %44 = arith.addf %41, %43 : vector<8x1xf32>
    %c0_27 = arith.constant 0 : index
    %c0_28 = arith.constant 0 : index
    %45 = vector.load %arg8[%c0_27, %c0_28] : memref<8x1xf32, #tpu.memory_space<vmem>>, vector<8x1xf32>
    tpu.vector_store %arg8[%c0_27, %c0_28], %44 {strides = array<i32>} : memref<8x1xf32, #tpu.memory_space<vmem>>, vector<8x1xf32>,
    %c0_i32_29 = arith.constant 0 : i32
    %46 = arith.cmpi eq, %arg1, %c0_i32_29 : i32
    %47 = arith.extui %46 : i1 to i32
    %c0_i32_30 = arith.constant 0 : i32
    %48 = arith.cmpi ne, %47, %c0_i32_30 : i32
    scf.if %48 {
      %c0_31 = arith.constant 0 : index
      %c0_32 = arith.constant 0 : index
      %49 = vector.load %arg5[%c0_31, %c0_32] : memref<8x1xf32, #tpu.memory_space<vmem>>, vector<8x1xf32>
      %c0_33 = arith.constant 0 : index
      %c0_34 = arith.constant 0 : index
      %c0_35 = arith.constant 0 : index
      %50 = vector.load %arg4[%c0_33, %c0_34, %c0_35] : memref<1x8x4xf32, #tpu.memory_space<vmem>>, vector<1x8x1xf32>
      %51 = vector.shape_cast %50 : vector<1x8x1xf32> to vector<8x1xf32>
      %52 = vector.shape_cast %49 : vector<8x1xf32> to vector<1x8x1xf32>
      tpu.vector_store %arg4[%c0_33, %c0_34, %c0_35], %52 {strides = array<i32>} : memref<1x8x4xf32, #tpu.memory_space<vmem>>, vector<1x8x1xf32>,
      %c0_36 = arith.constant 0 : index
      %c0_37 = arith.constant 0 : index
      %53 = vector.load %arg6[%c0_36, %c0_37] : memref<8x1xf32, #tpu.memory_space<vmem>>, vector<8x1xf32>
      %c0_38 = arith.constant 0 : index
      %c0_39 = arith.constant 0 : index
      %c1 = arith.constant 1 : index
      %54 = vector.load %arg4[%c0_38, %c0_39, %c1] : memref<1x8x4xf32, #tpu.memory_space<vmem>>, vector<1x8x1xf32>
      %55 = vector.shape_cast %54 : vector<1x8x1xf32> to vector<8x1xf32>
      %56 = vector.shape_cast %53 : vector<8x1xf32> to vector<1x8x1xf32>
      tpu.vector_store %arg4[%c0_38, %c0_39, %c1], %56 {strides = array<i32>} : memref<1x8x4xf32, #tpu.memory_space<vmem>>, vector<1x8x1xf32>,
      %c0_40 = arith.constant 0 : index
      %c0_41 = arith.constant 0 : index
      %57 = vector.load %arg7[%c0_40, %c0_41] : memref<8x1xf32, #tpu.memory_space<vmem>>, vector<8x1xf32>
      %c0_42 = arith.constant 0 : index
      %c0_43 = arith.constant 0 : index
      %c2 = arith.constant 2 : index
      %58 = vector.load %arg4[%c0_42, %c0_43, %c2] : memref<1x8x4xf32, #tpu.memory_space<vmem>>, vector<1x8x1xf32>
      %59 = vector.shape_cast %58 : vector<1x8x1xf32> to vector<8x1xf32>
      %60 = vector.shape_cast %57 : vector<8x1xf32> to vector<1x8x1xf32>
      tpu.vector_store %arg4[%c0_42, %c0_43, %c2], %60 {strides = array<i32>} : memref<1x8x4xf32, #tpu.memory_space<vmem>>, vector<1x8x1xf32>,
      %c0_44 = arith.constant 0 : index
      %c0_45 = arith.constant 0 : index
      %61 = vector.load %arg8[%c0_44, %c0_45] : memref<8x1xf32, #tpu.memory_space<vmem>>, vector<8x1xf32>
      %c0_46 = arith.constant 0 : index
      %c0_47 = arith.constant 0 : index
      %c3 = arith.constant 3 : index
      %62 = vector.load %arg4[%c0_46, %c0_47, %c3] : memref<1x8x4xf32, #tpu.memory_space<vmem>>, vector<1x8x1xf32>
      %63 = vector.shape_cast %62 : vector<1x8x1xf32> to vector<8x1xf32>
      %64 = vector.shape_cast %61 : vector<8x1xf32> to vector<1x8x1xf32>
      tpu.vector_store %arg4[%c0_46, %c0_47, %c3], %64 {strides = array<i32>} : memref<1x8x4xf32, #tpu.memory_space<vmem>>, vector<1x8x1xf32>,
    } else {
    }
    return
  }
  func.func @transform_0(%arg0: i32, %arg1: i32) -> (i32, i32) {
    %c1_i32 = arith.constant 1 : i32
    %0 = arith.muli %arg0, %c1_i32 : i32
    %1 = arith.addi %0, %arg1 : i32
    %c0_i32 = arith.constant 0 : i32
    %c0_i32_0 = arith.constant 0 : i32
    return %c0_i32, %1 : i32, i32
  }
  func.func @transform_1(%arg0: i32, %arg1: i32) -> (i32, i32) {
    %c1_i32 = arith.constant 1 : i32
    %0 = arith.muli %arg0, %c1_i32 : i32
    %1 = arith.addi %0, %arg1 : i32
    %c0_i32 = arith.constant 0 : i32
    %c0_i32_0 = arith.constant 0 : i32
    return %c0_i32, %1 : i32, i32
  }
  func.func @transform_2(%arg0: i32, %arg1: i32) -> (i32, i32, i32) {
    %c0_i32 = arith.constant 0 : i32
    %c0_i32_0 = arith.constant 0 : i32
    %c0_i32_1 = arith.constant 0 : i32
    return %arg0, %c0_i32, %c0_i32_0 : i32, i32, i32
  }
}

</mosaic_0001>

<llo_original>
// kernel: tpu_custom_call.1
$region0: #{tpu_custom_call.1}
  #allocation0 [shape = 'u32[]', space=smem, size = 0x4, offset = 0x4, fixed_abs, tag = 'smem constant byte address 0x4 - core index']
  #allocation1 [shape = 'u32[144,128]{1,0:T(1,128)}', space=vmem, size = 0x12000, scoped, tag = 'internal scratch']
  #allocation2 [shape = 'f32[8,1]{1,0:T(8,128)}', space=vmem, size = 0x1000, scoped, tag = 'scratch operand']
  #allocation3 [shape = 'f32[8,1]{1,0:T(8,128)}', space=vmem, size = 0x1000, scoped, tag = 'scratch operand']
  #allocation4 [shape = 'f32[8,1]{1,0:T(8,128)}', space=vmem, size = 0x1000, scoped, tag = 'scratch operand']
  #allocation5 [shape = 'f32[8,1]{1,0:T(8,128)}', space=vmem, size = 0x1000, scoped, tag = 'scratch operand']
  %s0 = inlined_call_operand.hbm [shape: f32[8,256], index: 0, kind: input, shape index: {}]
  %s1 = inlined_call_operand.hbm [shape: bf16[8,256], index: 1, kind: input, shape index: {}]
  %s2 = inlined_call_operand.vmem [shape: f32[2,8,4], index: 2, kind: output, shape index: {}]
  %s3 = sld [smem:[#allocation0]]
  $region57: #{tpu_custom_call.1} parent=0
    _
  %s5 = ssub.s32 1, %s3
  %s6 = scalar_select 0, %s5, %s3
  $region1: #{tpu_custom_call.1} parent=0
    #allocation6 [shape = 'u8[8192]{0}', space=vmem, size = 0x2000, scoped, tag = 'input window, operand 0']
    #allocation7 [shape = 's32[2]{0}', space=sflag, size = 0x8, scoped, tag = 'scoped memory for tpu_custom_call.1']
    #allocation8 [shape = 'u8[4096]{0}', space=vmem, size = 0x1000, scoped, tag = 'input window, operand 1']
    #allocation9 [shape = 's32[2]{0}', space=sflag, size = 0x8, scoped, tag = 'scoped memory for tpu_custom_call.1']
    %7 = vsyncpa [#allocation7], 0
    %s8 = scalar_lea.sflag [#allocation7], 1
    %9 = vsyncpa %s8, 0
    %10 = vsyncpa [#allocation9], 0
    %s11 = scalar_lea.sflag [#allocation9], 1
    %12 = vsyncpa %s11, 0
    loop: start=0, step=1, limit=4
    $region2: #{tpu_custom_call.1} parent=1 // loop_pre_header
      _
    $region3: #{tpu_custom_call.1} parent=1 // loop_header
      %s14 = sphi 0, %s18
      %p15 = scmp.ge.s32.totalorder %s14, 4
      %s21 = sphi 0, %s33
      %s22 = sphi 0, %s29
      %s23 = sphi 0, %s21
      %s24 = sphi 0, %s22
      %s25 = sphi 0, %s23
      %s26 = sphi 0, %s24
      %s38 = sphi 0, %s40
      %s41 = sphi 0, %s38
      %s42 = sphi 0, %s41
      %s58 = sphi 0, %s42
      %s66 = sphi 0, %s68
      %s69 = sphi 0, %s66
      %s70 = sphi 0, %s69
      %s86 = sphi 0, %s70
      %s92 = sphi 0, %s94
      %s95 = sphi 0, %s92
      %s96 = sphi 0, %s95
      %s112 = sphi 0, %s96
    $region4: #{tpu_custom_call.1} parent=1 // loop_header_branch
      %17 = sbr.rel (%p15) target = $region8
    $region5: #{tpu_custom_call.1} parent=1 // loop_body
      %s19 = ssub.s32 %s14, 1
      %s20 = ssub.s32 %s14, 2
      %s27 = sadd.s32 1, %s22
      %p28 = scmp.ge.s32.totalorder %s27, 1
      %s29 = scalar_select %p28, 0, %s27
      %s30 = sadd.s32 1, %s21
      %s31 = scalar_select %p28, %s30, %s21
      %p32 = scmp.ge.s32.totalorder %s31, 2
      %s33 = scalar_select %p32, 0, %s31
      %s34 = sadd.s32 %s21, %s22
      %s35 = sadd.s32 %s33, %s29
      %s36 = ssub.s32 %s34, %s35
      %p37 = scmp.eq.s32.totalorder %s36, 0
      %s39 = sadd.s32 %s38, 1
      %s40 = scalar_select %p37, %s38, %s39
      %p43 = pneg %p37
      %p44 = scmp.eq.s32.totalorder %s14, 1
      %p45 = por %p43, %p44
      %p46 = scmp.ne.s32.totalorder %s38, %s41
      %p47 = scmp.eq.s32.totalorder %s14, 0
      %p48 = por %p46, %p47
      %p49 = scmp.ne.s32.totalorder %s38, %s41
      %p50 = scmp.eq.s32.totalorder %s19, 1
      %p51 = por %p49, %p50
      %p52 = scmp.ne.s32.totalorder %s41, %s42
      %p53 = scmp.eq.s32.totalorder %s19, 0
      %p54 = por %p52, %p53
      %p55 = scmp.ne.s32.totalorder %s41, %s42
      %p56 = scmp.eq.s32.totalorder %s20, 1
      %p57 = por %p55, %p56
      %p59 = scmp.ne.s32.totalorder %s42, %s58
      %p60 = scmp.eq.s32.totalorder %s20, 0
      %p61 = por %p59, %p60
      %s62 = sadd.s32 %s21, %s22
      %s63 = sadd.s32 %s33, %s29
      %s64 = ssub.s32 %s62, %s63
      %p65 = scmp.eq.s32.totalorder %s64, 0
      %s67 = sadd.s32 %s66, 1
      %s68 = scalar_select %p65, %s66, %s67
      %p71 = pneg %p65
      %p72 = scmp.eq.s32.totalorder %s14, 1
      %p73 = por %p71, %p72
      %p74 = scmp.ne.s32.totalorder %s66, %s69
      %p75 = scmp.eq.s32.totalorder %s14, 0
      %p76 = por %p74, %p75
      %p77 = scmp.ne.s32.totalorder %s66, %s69
      %p78 = scmp.eq.s32.totalorder %s19, 1
      %p79 = por %p77, %p78
      %p80 = scmp.ne.s32.totalorder %s69, %s70
      %p81 = scmp.eq.s32.totalorder %s19, 0
      %p82 = por %p80, %p81
      %p83 = scmp.ne.s32.totalorder %s69, %s70
      %p84 = scmp.eq.s32.totalorder %s20, 1
      %p85 = por %p83, %p84
      %p87 = scmp.ne.s32.totalorder %s70, %s86
      %p88 = scmp.eq.s32.totalorder %s20, 0
      %p89 = por %p87, %p88
      %s90 = ssub.s32 %s21, %s33
      %p91 = scmp.eq.s32.totalorder %s90, 0
      %s93 = sadd.s32 %s92, 1
      %s94 = scalar_select %p91, %s92, %s93
      %p97 = pneg %p91
      %p98 = scmp.eq.s32.totalorder %s14, 1
      %p99 = por %p97, %p98
      %p100 = scmp.ne.s32.totalorder %s92, %s95
      %p101 = scmp.eq.s32.totalorder %s14, 0
      %p102 = por %p100, %p101
      %p103 = scmp.ne.s32.totalorder %s92, %s95
      %p104 = scmp.eq.s32.totalorder %s19, 1
      %p105 = por %p103, %p104
      %p106 = scmp.ne.s32.totalorder %s95, %s96
      %p107 = scmp.eq.s32.totalorder %s19, 0
      %p108 = por %p106, %p107
      %p109 = scmp.ne.s32.totalorder %s95, %s96
      %p110 = scmp.eq.s32.totalorder %s20, 1
      %p111 = por %p109, %p110
      %p113 = scmp.ne.s32.totalorder %s96, %s112
      %p114 = scmp.eq.s32.totalorder %s20, 0
      %p115 = por %p113, %p114
      %p116 = scmp.le.s32.totalorder 1, %s14
      %p117 = scmp.lt.s32.totalorder %s14, 3
      %p118 = pnand %p116, %p117
      %p119 = pneg %p118
      // Predicated region
      $region9: #{tpu_custom_call.1} parent=5 // pred_check
        _
      $region10: #{tpu_custom_call.1} parent=5 // pred_check_branch
        %121 = sbr.rel (%p118) target = $region12
      $region11: #{tpu_custom_call.1} parent=5 // pred_region
        %s122 = ssub.s32 %s14, 1
      $region12: #{tpu_custom_call.1} parent=5 // pred_fallthru
        _
      %p123 = scmp.lt.s32.totalorder %s14, 2
      // Predicated region
      $region13: #{tpu_custom_call.1} parent=5 // pred_check
        %p124 = pneg %p123
      $region14: #{tpu_custom_call.1} parent=5 // pred_check_branch
        %126 = sbr.rel (%p124) target = $region16
      $region15: #{tpu_custom_call.1} parent=5 // pred_region
        // Predicated region
        $region17: #{tpu_custom_call.1} parent=15 // pred_check
          %p127 = pneg %p48
        $region18: #{tpu_custom_call.1} parent=15 // pred_check_branch
          %129 = sbr.rel (%p127) target = $region20
        $region19: #{tpu_custom_call.1} parent=15 // pred_region
          %s130 = sand.u32 %s38, 1
          %s131 = scalar_lea.sflag [#allocation7], %s130
          %s132 = sand.u32 %s38, 1
          %s133 = smul.addr %s132, 8
          %s134 = scalar_lea.vmem [#allocation6], %s133
          %s135 = sadd.s32 %s21, %s22
          %s137 = ssub.s32 128, 128
          %138 = vsyncadd %s131, %s137
          %s139 = smul.addr %s135, 128
          %s140 = scalar_lea.hbm %s0, %s139
          %s142 = sshll.u32 %s134, 4
          %s143 = int_to_ptr.vmem [resolvable:$true] %s142
          %145 = dma.hbm_to_vmem [thread:$0]  %s140, 128, %s143, %s131
        $region20: #{tpu_custom_call.1} parent=15 // pred_fallthru
          _
        // Predicated region
        $region21: #{tpu_custom_call.1} parent=15 // pred_check
          %p146 = pneg %p76
        $region22: #{tpu_custom_call.1} parent=15 // pred_check_branch
          %148 = sbr.rel (%p146) target = $region24
        $region23: #{tpu_custom_call.1} parent=15 // pred_region
          %s149 = sand.u32 %s66, 1
          %s150 = scalar_lea.sflag [#allocation9], %s149
          %s151 = sand.u32 %s66, 1
          %s152 = smul.addr %s151, 4
          %s153 = scalar_lea.vmem [#allocation8], %s152
          %s154 = sadd.s32 %s21, %s22
          %s156 = ssub.s32 64, 64
          %157 = vsyncadd %s150, %s156
          %s158 = smul.addr %s154, 64
          %s159 = scalar_lea.hbm %s1, %s158
          %s161 = sshll.u32 %s153, 4
          %s162 = int_to_ptr.vmem [resolvable:$true] %s161
          %164 = dma.hbm_to_vmem [thread:$0]  %s159, 64, %s162, %s150
        $region24: #{tpu_custom_call.1} parent=15 // pred_fallthru
          _
      $region16: #{tpu_custom_call.1} parent=5 // pred_fallthru
        _
      %p165 = scmp.le.s32.totalorder 1, %s14
      %p166 = scmp.lt.s32.totalorder %s14, 3
      %p167 = pnand %p165, %p166
      %p168 = pneg %p167
      // Predicated region
      $region25: #{tpu_custom_call.1} parent=5 // pred_check
        _
      $region26: #{tpu_custom_call.1} parent=5 // pred_check_branch
        %170 = sbr.rel (%p167) target = $region28
      $region27: #{tpu_custom_call.1} parent=5 // pred_region
        %s171 = ssub.s32 %s14, 1
        %s172 = sand.u32 %s41, 1
        %s173 = scalar_lea.sflag [#allocation7], %s172
        %s174 = sand.u32 %s41, 1
        %s175 = smul.addr %s174, 8
        %s176 = scalar_lea.vmem [#allocation6], %s175
        // Predicated region
        $region29: #{tpu_custom_call.1} parent=27 // pred_check
          %p177 = pneg %p54
        $region30: #{tpu_custom_call.1} parent=27 // pred_check_branch
          %179 = sbr.rel (%p177) target = $region32
        $region31: #{tpu_custom_call.1} parent=27 // pred_region
          %180 = dma.done %s173, 128
        $region32: #{tpu_custom_call.1} parent=27 // pred_fallthru
          _
        %s181 = sand.u32 %s69, 1
        %s182 = scalar_lea.sflag [#allocation9], %s181
        %s183 = sand.u32 %s69, 1
        %s184 = smul.addr %s183, 4
        %s185 = scalar_lea.vmem [#allocation8], %s184
        // Predicated region
        $region33: #{tpu_custom_call.1} parent=27 // pred_check
          %p186 = pneg %p82
        $region34: #{tpu_custom_call.1} parent=27 // pred_check_branch
          %188 = sbr.rel (%p186) target = $region36
        $region35: #{tpu_custom_call.1} parent=27 // pred_region
          %189 = dma.done %s182, 64
        $region36: #{tpu_custom_call.1} parent=27 // pred_fallthru
          _
        %s190 = sand.u32 %s41, 1
        %s191 = scalar_lea.sflag [#allocation7], %s190
        %s192 = sand.u32 %s41, 1
        %s193 = smul.addr %s192, 8
        %s194 = scalar_lea.vmem [#allocation6], %s193
        %p195 = pneg %p54
        %p196 = pneg %p51
        %s197 = sand.u32 %s69, 1
        %s198 = scalar_lea.sflag [#allocation9], %s197
        %s199 = sand.u32 %s69, 1
        %s200 = smul.addr %s199, 4
        %s201 = scalar_lea.vmem [#allocation8], %s200
        %p202 = pneg %p82
        %p203 = pneg %p79
        %p204 = pneg %p108
        %p205 = pneg %p105
        %p206 = scmp.lt.s32.totalorder %s23, 1
        %s207 = scalar_select %p206, %s23, 1
        %s208 = smul.addr %s207, 8
        %s209 = scalar_lea.vmem %s2, %s208
        %s210 = sadd.s32 %s23, %s24
        %s211 = sadd.s32 %s23, %s24
        %p212 = scmp.lt.s32.totalorder %s23, 1
        %s213 = scalar_select %p212, %s23, 1
        %s214 = smul.addr %s213, 8
        %s215 = scalar_lea.vmem %s2, %s214
        %p216 = scmp.eq.s32.totalorder %s24, 0
        // Predicated region
        $region37: #{tpu_custom_call.1} parent=27 // pred_check
          %p217 = pneg %p216
        $region38: #{tpu_custom_call.1} parent=27 // pred_check_branch
          %219 = sbr.rel (%p217) target = $region40
        $region39: #{tpu_custom_call.1} parent=27 // pred_region
          %vm220 = vcmask 7168
          %221 = vst.msk [vmem:[#allocation2] sm:$0xff] %vm220, 0.0
          %222 = vst.msk [vmem:[#allocation3] sm:$0xff] %vm220, 0.0
          %223 = vst.msk [vmem:[#allocation4] sm:$0xff] %vm220, 0.0
          %224 = vst.msk [vmem:[#allocation5] sm:$0xff] %vm220, 0.0
        $region40: #{tpu_custom_call.1} parent=27 // pred_fallthru
          _
        %v225 = vld [vmem:[%s176] sm:$0xff]
        %v226 = vld [vmem:[%s185] sm:$0xf]
        %v227 = vunpack.c.l.bf16 %v226
        %v228 = vand.u32 2147483647, %v225
        %v229 = vsub.f32 0.0, %v228
        %v230 = vmul.f32 %v229, 1.442695
        %v231 = vpow.pop %v230
        %v232 = vadd.f32 %v231, 1.0
        %v233 = vrcp.pop %v232
        %v234 = vmul.f32 1.0, %v233
        %vm235 = vcmp.ge.f32.partialorder %v225, 0.0
        %v236 = vsel %vm235, 1.0, %v231
        %v237 = vmul.f32 %v236, %v234
        %v238 = vmax.f32 %v225, 0.0
        %v239 = vmul.f32 %v225, %v227
        %v240 = vsub.f32 %v238, %v239
        %v241 = vadd.f32 %v231, 1.0
        %v242 = vlog2.pop %v241
        %v243 = vmul.f32 %v242, 0.6931472
        %v244 = vmul.f32 -0.5, %v231
        %v245 = vadd.f32 %v244, 1.0
        %v246 = vmul.f32 %v245, %v231
        %v247 = vand.u32 2147483647, %v231
        %vm248 = vcmp.lt.f32.partialorder %v247, 0.0004427343
        %v249 = vsel %vm248, %v246, %v243
        %v250 = vadd.f32 %v240, %v249
        %v251 = vld [vmem:[#allocation2] sm:$0xff]
        %v252 = vmul.f32 %v237, %v227
        %253 = vadd.xlane.f32.xlu0 %v252
        %v254 = vpop.xlane.xlu0 %253
        %v255 = vadd.f32 %v251, %v254
        %vm256 = vcmask 7168
        %257 = vst.msk [vmem:[#allocation2] sm:$0xff] %vm256, %v255
        %v258 = vld [vmem:[#allocation3] sm:$0xff]
        %259 = vadd.xlane.f32.xlu0 %v237
        %v260 = vpop.xlane.xlu0 %259
        %v261 = vadd.f32 %v258, %v260
        %262 = vst.msk [vmem:[#allocation3] sm:$0xff] %vm256, %v261
        %v263 = vld [vmem:[#allocation4] sm:$0xff]
        %264 = vadd.xlane.f32.xlu0 %v227
        %v265 = vpop.xlane.xlu0 %264
        %v266 = vadd.f32 %v263, %v265
        %267 = vst.msk [vmem:[#allocation4] sm:$0xff] %vm256, %v266
        %v268 = vld [vmem:[#allocation5] sm:$0xff]
        %269 = vadd.xlane.f32.xlu0 %v250
        %v270 = vpop.xlane.xlu0 %269
        %v271 = vadd.f32 %v268, %v270
        %272 = vst.msk [vmem:[#allocation5] sm:$0xff] %vm256, %v271
        // Predicated region
        $region41: #{tpu_custom_call.1} parent=27 // pred_check
          %p273 = pneg %p216
        $region42: #{tpu_custom_call.1} parent=27 // pred_check_branch
          %275 = sbr.rel (%p273) target = $region44
        $region43: #{tpu_custom_call.1} parent=27 // pred_region
          %v276 = vld [vmem:[#allocation2] sm:$0xff]
          %277 = vst.msk [vmem:[%s215] sm:$0xff] %vm256, %v276
          %v278 = vld [vmem:[#allocation3] sm:$0xff]
          %280 = vrot.lane.b32.xlu0 %v278, 1
          %v281 = vpop.permute.xlu0 %280
          %vm283 = vcmask 15368
          %284 = vst.msk [vmem:[%s215] sm:$0xff] %vm283, %v281
          %v285 = vld [vmem:[#allocation4] sm:$0xff]
          %287 = vrot.lane.b32.xlu0 %v285, 2
          %v288 = vpop.permute.xlu0 %287
          %vm290 = vcmask 23568
          %291 = vst.msk [vmem:[%s215] sm:$0xff] %vm290, %v288
          %v292 = vld [vmem:[#allocation5] sm:$0xff]
          %294 = vrot.lane.b32.xlu0 %v292, 3
          %v295 = vpop.permute.xlu0 %294
          %vm297 = vcmask 31768
          %298 = vst.msk [vmem:[%s215] sm:$0xff] %vm297, %v295
        $region44: #{tpu_custom_call.1} parent=27 // pred_fallthru
          _
        %p299 = scmp.lt.s32.totalorder %s23, 1
        %s300 = scalar_select %p299, %s23, 1
        %s301 = smul.addr %s300, 8
        %s302 = scalar_lea.vmem %s2, %s301
        // Predicated region
        $region45: #{tpu_custom_call.1} parent=27 // pred_check
          %p303 = pneg %p105
        $region46: #{tpu_custom_call.1} parent=27 // pred_check_branch
          %305 = sbr.rel (%p303) target = $region48
        $region47: #{tpu_custom_call.1} parent=27 // pred_region
          _
        $region48: #{tpu_custom_call.1} parent=27 // pred_fallthru
          _
      $region28: #{tpu_custom_call.1} parent=5 // pred_fallthru
        _
      %p306 = scmp.le.s32.totalorder 2, %s14
      // Predicated region
      $region49: #{tpu_custom_call.1} parent=5 // pred_check
        %p307 = pneg %p306
      $region50: #{tpu_custom_call.1} parent=5 // pred_check_branch
        %309 = sbr.rel (%p307) target = $region52
      $region51: #{tpu_custom_call.1} parent=5 // pred_region
        %s310 = ssub.s32 %s14, 2
        // Predicated region
        $region53: #{tpu_custom_call.1} parent=51 // pred_check
          %p311 = pneg %p111
        $region54: #{tpu_custom_call.1} parent=51 // pred_check_branch
          %313 = sbr.rel (%p311) target = $region56
        $region55: #{tpu_custom_call.1} parent=51 // pred_region
          %p314 = scmp.lt.s32.totalorder %s25, 1
          %s315 = scalar_select %p314, %s25, 1
          %s316 = smul.addr %s315, 8
          %s317 = scalar_lea.vmem %s2, %s316
        $region56: #{tpu_custom_call.1} parent=51 // pred_fallthru
          _
      $region52: #{tpu_custom_call.1} parent=5 // pred_fallthru
        _
    $region6: #{tpu_custom_call.1} parent=1 // loop_footer
      %s18 = sadd.s32 1, %s14
    $region7: #{tpu_custom_call.1} parent=1 // loop_footer_branch
      %13 = sbr.rel target = $region3
    $region8: #{tpu_custom_call.1} parent=1 // loop_exit
      _
    %318 = vsyncpa [#allocation7], 1
    %s319 = scalar_lea.sflag [#allocation7], 1
    %320 = vsyncpa %s319, 1
    %321 = vsyncpa [#allocation9], 1
    %s322 = scalar_lea.sflag [#allocation9], 1
    %323 = vsyncpa %s322, 1

</llo_original>
